<compile_context>
chip_gen: v7x
topology: tpu7x:2x2x1
jax: 0.10.0
libtpu: 0.0.40
codegen_flags: <defaults>
</compile_context>

<pallas_src>
import functools
import math

import jax
import jax.numpy as jnp
from jax import lax
from jax.experimental import pallas as pl
from jax.experimental.pallas import tpu as pltpu


# ------------------------------ fused kernel ------------------------------

def _attention_if_kernel(fused_ref, v_ref, a_ref, w_ref, b_ref, o_ref, *, T, B):
    """One output-feature tile of the AttentionMechanism forward.

    fused_ref: [T*B, D]   shared fc1/fc2 input (full feature dim D)
    v_ref/a_ref: [T*B, n] modality features for this feature tile
    w_ref: [D, 2n]        [fc1_w_tile | fc2_w_tile]  -> one MXU matmul
    b_ref: [1, 2n]        [fc1_b_tile | fc2_b_tile]
    o_ref: [T*B, n]       IF spikes (single dense store)
    """
    n = v_ref.shape[-1]

    # (1) fc1+fc2 for ALL time steps: one batched MXU matmul, f32 accumulation,
    #     bias added once (no per-time-step matmuls, no weight vreg residency).
    wva = jnp.dot(fused_ref[...], w_ref[...],
                  preferred_element_type=jnp.float32) + b_ref[...]
    # The fc1/fc2 split happens once per kernel (it used to be per time step),
    # so a non-128-aligned lane boundary for small n costs a single select.
    w_v = wva[:, :n]
    w_a = wva[:, n:]

    # (2) Non-recurrent elementwise work over all T*B rows (dense VPU tiles).
    num = w_v * v_ref[...] + w_a * a_ref[...]   # mix numerator
    mix = w_v + w_a                             # feeds the normalizer

    # Per-time-step normalizer (sum over the B batch rows of that step) and
    # pre-activation; independent of the membrane recurrence -> fully hoisted.
    pre = []
    for t in range(T):
        r = t * B
        norm = jnp.sum(mix[r:r + B, :], axis=0, keepdims=True) + 1e-10  # [1, n]
        pre.append(num[r:r + B, :] * pl.reciprocal(norm))               # [B, n]

    # (3) IF neuron recurrence (the only serial dependence): integrate, fire at
    #     threshold 1.0, hard reset to v_reset = 0.  Statically unrolled VPU work.
    vmem = jnp.zeros((B, n), jnp.float32)
    spikes = []
    for t in range(T):
        vmem = vmem + pre[t]
        s = (vmem >= 1.0).astype(jnp.float32)
        spikes.append(s)
        vmem = vmem * (1.0 - s)

    # Single lane/sublane-dense store of all T*B spike rows.
    o_ref[...] = jnp.concatenate(spikes, axis=0)


# ------------------------- parameter packing + wrapper -------------------------

def prepare_params(params, *, feature_tile=None):
    """Pack fc1/fc2 weights ONCE into the kernel layout (not in the hot path).

    Returns (w_cat [D, 2N], b_cat [1, 2N], tn).  Column block j of width 2*tn
    holds [fc1 cols j*tn:(j+1)*tn | fc2 cols j*tn:(j+1)*tn].
    feature_tile=None keeps a single tile (nt=1: best for v5e/v6e and small
    problems); pass a multiple of 128 dividing N to enable the feature-tiled
    ("parallel") path for v7x's two TensorCores / very large N.
    """
    w1, b1 = params['fc1']
    w2, b2 = params['fc2']
    D, N = w1.shape
    if feature_tile is None or feature_tile >= N:
        tn = N
    else:
        assert N % feature_tile == 0 and feature_tile % 128 == 0
        tn = feature_tile
    nt = N // tn
    w_cat = jnp.concatenate(
        [w1.reshape(D, nt, tn), w2.reshape(D, nt, tn)], axis=2).reshape(D, 2 * N)
    b_cat = jnp.concatenate(
        [b1.reshape(1, nt, tn), b2.reshape(1, nt, tn)], axis=2).reshape(1, 2 * N)
    return w_cat, b_cat, tn


def attention_mechanism_forward(w_cat, b_cat, v, a, fused, *, tn):
    """AttentionMechanism.forward(v, a, fused) -> spikes.  Shapes: [T, B, ...]."""
    T, B, D = fused.shape
    N = v.shape[-1]
    assert v.shape == (T, B, N) and a.shape == (T, B, N)
    assert w_cat.shape == (D, 2 * N) and N % tn == 0
    nt = N // tn
    TB = T * B

    # Contiguous [T,B,X] -> [T*B,X] reshapes are layout-free and give the kernel
    # lane/sublane-dense 2-D blocks (dense loads, one dense spike store).
    fused2d = fused.reshape(TB, D)
    v2d = v.reshape(TB, N)
    a2d = a.reshape(TB, N)

    # Explicit VMEM budget: blocks are double-buffered by the pipeline; keep the
    # full-N fallback path portable to v7x's 64 MiB physical VMEM.
    block_bytes = 4 * (TB * D + 3 * TB * tn + 2 * D * tn + 2 * tn)
    vmem_limit = int(min(max(2 * block_bytes + (4 << 20), 32 << 20), 64 << 20))

    kernel = functools.partial(_attention_if_kernel, T=T, B=B)
    out2d = pl.pallas_call(
        kernel,
        out_shape=jax.ShapeDtypeStruct((TB, N), jnp.float32),
        grid=(nt,),
        in_specs=[pl.BlockSpec((TB, D), lambda j: (0, 0)),       # fused (shared)
                  pl.BlockSpec((TB, tn), lambda j: (0, j)),      # v tile
                  pl.BlockSpec((TB, tn), lambda j: (0, j)),      # a tile
                  pl.BlockSpec((D, 2 * tn), lambda j: (0, j)),   # [fc1|fc2] weights
                  pl.BlockSpec((1, 2 * tn), lambda j: (0, j))],  # [fc1|fc2] bias
        out_specs=pl.BlockSpec((TB, tn), lambda j: (0, j)),
        compiler_params=pltpu.CompilerParams(
            dimension_semantics=("parallel",),
            vmem_limit_bytes=vmem_limit),
    )(fused2d, v2d, a2d, w_cat, b_cat)
    return out2d.reshape(T, B, N)


# ------------------------- params + pure-JAX reference -------------------------

def init_params(key, input_dim, output_dim):
    def linear_init(k, in_f, out_f):
        k1, k2 = jax.random.split(k)
        bound = 1.0 / math.sqrt(in_f)
        w = jax.random.uniform(k1, (in_f, out_f), jnp.float32, -bound, bound)
        b = jax.random.uniform(k2, (out_f,), jnp.float32, -bound, bound)
        return w, b
    k1, k2 = jax.random.split(key)
    return {'fc1': linear_init(k1, input_dim, output_dim),
            'fc2': linear_init(k2, input_dim, output_dim)}


def attention_mechanism_ref(params, v, a, fused):
    """Pure-JAX reference (HIGHEST-precision matmul to mirror the f32 MXU path)."""
    w1, b1 = params['fc1']
    w2, b2 = params['fc2']

    def dot(x, w):
        return lax.dot_general(x, w, (((x.ndim - 1,), (0,)), ((), ())),
                               precision=lax.Precision.HIGHEST)

    w_v = dot(fused, w1) + b1
    w_a = dot(fused, w2) + b2
    norm = w_v.sum(axis=1, keepdims=True) + w_a.sum(axis=1, keepdims=True) + 1e-10
    x = (w_v / norm) * v + (w_a / norm) * a
    vmem = jnp.zeros_like(x[0])
    outs = []
    for t in range(x.shape[0]):
        vmem = vmem + x[t]
        s = (vmem >= 1.0).astype(jnp.float32)
        outs.append(s)
        vmem = vmem * (1.0 - s)
    return jnp.stack(outs, axis=0)


# ----------------------------------- test -----------------------------------

if __name__ == "__main__":
    # (T, B, input_dim, output_dim): first config matches the parent model's
    # Attention_cross dims (48 -> 32); second has a 128-aligned feature dim so the
    # optional feature-tiled ("parallel") path can also be exercised.
    configs = [(4, 2, 48, 32),
               (4, 8, 128, 256)]

    key = jax.random.PRNGKey(0)
    fwd = jax.jit(attention_mechanism_forward, static_argnames=("tn",))

    for (T, B, D, N) in configs:
        key, kp, kv, ka, kf = jax.random.split(key, 5)
        params = init_params(kp, D, N)
        v = jax.random.normal(kv, (T, B, N), jnp.float32)
        a = jax.random.normal(ka, (T, B, N), jnp.float32)
        fused = jax.random.normal(kf, (T, B, D), jnp.float32)
        ref = attention_mechanism_ref(params, v, a, fused)

        # Default single-tile path (nt=1): best for v5e/v6e and small problems.
        w_cat, b_cat, tn = prepare_params(params)
        out = fwd(w_cat, b_cat, v, a, fused, tn=tn)
        jax.block_until_ready(out)
        assert out.shape == (T, B, N) and out.dtype == jnp.float32
        # Spikes are exactly {0,1}: mean |diff| == flipped-spike fraction.  Allow a
        # tiny fraction for threshold rounding differences between the MXU and XLA
        # accumulation orders; real bugs give mismatch fractions >> this.
        mismatch = float(jnp.mean(jnp.abs(out - ref)))
        assert mismatch < 0.02, f"spike mismatch fraction {mismatch}"

        # Feature-tiled "parallel" path (v7x / large-N): correctness check when
        # N allows 128-lane tiles.
        if N % 128 == 0 and N > 128:
            w_cat_t, b_cat_t, tn_t = prepare_params(params, feature_tile=128)
            out_t = fwd(w_cat_t, b_cat_t, v, a, fused, tn=tn_t)
            jax.block_until_ready(out_t)
            mismatch_t = float(jnp.mean(jnp.abs(out_t - ref)))
            assert mismatch_t < 0.02, f"tiled spike mismatch fraction {mismatch_t}"

    print("KERNEL_OK")
</pallas_src>

<mosaic_0001>
module attributes {stable_mosaic.version = 11 : i64} {
  func.func @_attention_if_kernel(%arg0: i32, %arg1: memref<8x48xf32, #tpu.memory_space<vmem>>, %arg2: memref<8x32xf32, #tpu.memory_space<vmem>>, %arg3: memref<8x32xf32, #tpu.memory_space<vmem>>, %arg4: memref<48x64xf32, #tpu.memory_space<vmem>>, %arg5: memref<1x64xf32, #tpu.memory_space<vmem>>, %arg6: memref<8x32xf32, #tpu.memory_space<vmem>>) attributes {dimension_semantics = [#tpu.dimension_semantics<parallel>], iteration_bounds = array<i64: 1>, scalar_prefetch = 0 : i64, scratch_operands = 0 : i64, tpu.core_type = #tpu.core_type<tc>, window_params = [{pipeline_mode = #tpu.pipeline_mode<synchronous>, transform_indices = @transform_0, window_bounds = array<i64: 8, 48>}, {transform_indices = @transform_1, window_bounds = array<i64: 8, 32>}, {transform_indices = @transform_2, window_bounds = array<i64: 8, 32>}, {transform_indices = @transform_3, window_bounds = array<i64: 48, 64>}, {transform_indices = @transform_4, window_bounds = array<i64: 1, 64>}, {transform_indices = @transform_5, window_bounds = array<i64: 8, 32>}]} {
    %c0 = arith.constant 0 : index
    %c0_0 = arith.constant 0 : index
    %0 = vector.load %arg1[%c0, %c0_0] : memref<8x48xf32, #tpu.memory_space<vmem>>, vector<8x48xf32>
    %c0_1 = arith.constant 0 : index
    %c0_2 = arith.constant 0 : index
    %1 = vector.load %arg4[%c0_1, %c0_2] : memref<48x64xf32, #tpu.memory_space<vmem>>, vector<48x64xf32>
    %cst = arith.constant dense<0.000000e+00> : vector<8x64xf32>
    %2 = tpu.matmul %0, %1, %cst {dimension_numbers = #tpu.dot_dimension_numbers<[1], [0], [0], [1], [0, 0, 1, 1], [], []>} : vector<8x48xf32>, vector<48x64xf32>, vector<8x64xf32> -> vector<8x64xf32>
    %c0_3 = arith.constant 0 : index
    %c0_4 = arith.constant 0 : index
    %3 = vector.load %arg5[%c0_3, %c0_4] : memref<1x64xf32, #tpu.memory_space<vmem>>, vector<1x64xf32>
    %4 = vector.broadcast %3 : vector<1x64xf32> to vector<8x64xf32>
    %5 = arith.addf %2, %4 : vector<8x64xf32>
    %6 = vector.extract_strided_slice %5 {offsets = [0, 0], sizes = [8, 32], strides = [1, 1]} : vector<8x64xf32> to vector<8x32xf32>
    %7 = vector.extract_strided_slice %5 {offsets = [0, 32], sizes = [8, 32], strides = [1, 1]} : vector<8x64xf32> to vector<8x32xf32>
    %c0_5 = arith.constant 0 : index
    %c0_6 = arith.constant 0 : index
    %8 = vector.load %arg2[%c0_5, %c0_6] : memref<8x32xf32, #tpu.memory_space<vmem>>, vector<8x32xf32>
    %9 = arith.mulf %6, %8 : vector<8x32xf32>
    %c0_7 = arith.constant 0 : index
    %c0_8 = arith.constant 0 : index
    %10 = vector.load %arg3[%c0_7, %c0_8] : memref<8x32xf32, #tpu.memory_space<vmem>>, vector<8x32xf32>
    %11 = arith.mulf %7, %10 : vector<8x32xf32>
    %12 = arith.addf %9, %11 : vector<8x32xf32>
    %13 = arith.addf %6, %7 : vector<8x32xf32>
    %14 = vector.extract_strided_slice %13 {offsets = [0, 0], sizes = [2, 32], strides = [1, 1]} : vector<8x32xf32> to vector<2x32xf32>
    %cst_9 = arith.constant dense<0.000000e+00> : vector<32xf32>
    %15 = vector.multi_reduction <add>, %14, %cst_9 [0] : vector<2x32xf32> to vector<32xf32>
    %16 = vector.shape_cast %15 : vector<32xf32> to vector<1x32xf32>
    %cst_10 = arith.constant 1.000000e-10 : f32
    %17 = vector.broadcast %cst_10 : f32 to vector<1x32xf32>
    %18 = arith.addf %16, %17 : vector<1x32xf32>
    %19 = vector.extract_strided_slice %12 {offsets = [0, 0], sizes = [2, 32], strides = [1, 1]} : vector<8x32xf32> to vector<2x32xf32>
    %20 = tpu.reciprocal %18 : vector<1x32xf32> -> vector<1x32xf32>
    %21 = vector.broadcast %20 : vector<1x32xf32> to vector<2x32xf32>
    %22 = arith.mulf %19, %21 : vector<2x32xf32>
    %23 = vector.extract_strided_slice %13 {offsets = [2, 0], sizes = [2, 32], strides = [1, 1]} : vector<8x32xf32> to vector<2x32xf32>
    %cst_11 = arith.constant dense<0.000000e+00> : vector<32xf32>
    %24 = vector.multi_reduction <add>, %23, %cst_11 [0] : vector<2x32xf32> to vector<32xf32>
    %25 = vector.shape_cast %24 : vector<32xf32> to vector<1x32xf32>
    %cst_12 = arith.constant 1.000000e-10 : f32
    %26 = vector.broadcast %cst_12 : f32 to vector<1x32xf32>
    %27 = arith.addf %25, %26 : vector<1x32xf32>
    %28 = vector.extract_strided_slice %12 {offsets = [2, 0], sizes = [2, 32], strides = [1, 1]} : vector<8x32xf32> to vector<2x32xf32>
    %29 = tpu.reciprocal %27 : vector<1x32xf32> -> vector<1x32xf32>
    %30 = vector.broadcast %29 : vector<1x32xf32> to vector<2x32xf32>
    %31 = arith.mulf %28, %30 : vector<2x32xf32>
    %32 = vector.extract_strided_slice %13 {offsets = [4, 0], sizes = [2, 32], strides = [1, 1]} : vector<8x32xf32> to vector<2x32xf32>
    %cst_13 = arith.constant dense<0.000000e+00> : vector<32xf32>
    %33 = vector.multi_reduction <add>, %32, %cst_13 [0] : vector<2x32xf32> to vector<32xf32>
    %34 = vector.shape_cast %33 : vector<32xf32> to vector<1x32xf32>
    %cst_14 = arith.constant 1.000000e-10 : f32
    %35 = vector.broadcast %cst_14 : f32 to vector<1x32xf32>
    %36 = arith.addf %34, %35 : vector<1x32xf32>
    %37 = vector.extract_strided_slice %12 {offsets = [4, 0], sizes = [2, 32], strides = [1, 1]} : vector<8x32xf32> to vector<2x32xf32>
    %38 = tpu.reciprocal %36 : vector<1x32xf32> -> vector<1x32xf32>
    %39 = vector.broadcast %38 : vector<1x32xf32> to vector<2x32xf32>
    %40 = arith.mulf %37, %39 : vector<2x32xf32>
    %41 = vector.extract_strided_slice %13 {offsets = [6, 0], sizes = [2, 32], strides = [1, 1]} : vector<8x32xf32> to vector<2x32xf32>
    %cst_15 = arith.constant dense<0.000000e+00> : vector<32xf32>
    %42 = vector.multi_reduction <add>, %41, %cst_15 [0] : vector<2x32xf32> to vector<32xf32>
    %43 = vector.shape_cast %42 : vector<32xf32> to vector<1x32xf32>
    %cst_16 = arith.constant 1.000000e-10 : f32
    %44 = vector.broadcast %cst_16 : f32 to vector<1x32xf32>
    %45 = arith.addf %43, %44 : vector<1x32xf32>
    %46 = vector.extract_strided_slice %12 {offsets = [6, 0], sizes = [2, 32], strides = [1, 1]} : vector<8x32xf32> to vector<2x32xf32>
    %47 = tpu.reciprocal %45 : vector<1x32xf32> -> vector<1x32xf32>
    %48 = vector.broadcast %47 : vector<1x32xf32> to vector<2x32xf32>
    %49 = arith.mulf %46, %48 : vector<2x32xf32>
    %cst_17 = arith.constant 0.000000e+00 : f32
    %50 = vector.broadcast %cst_17 : f32 to vector<2x32xf32>
    %51 = arith.addf %50, %22 : vector<2x32xf32>
    %cst_18 = arith.constant 1.000000e+00 : f32
    %52 = vector.broadcast %cst_18 : f32 to vector<2x32xf32>
    %53 = arith.cmpf oge, %51, %52 : vector<2x32xf32>
    %54 = arith.extui %53 : vector<2x32xi1> to vector<2x32xi32>
    %55 = arith.sitofp %54 : vector<2x32xi32> to vector<2x32xf32>
    %cst_19 = arith.constant 1.000000e+00 : f32
    %56 = vector.broadcast %cst_19 : f32 to vector<2x32xf32>
    %57 = arith.subf %56, %55 : vector<2x32xf32>
    %58 = arith.mulf %51, %57 : vector<2x32xf32>
    %59 = arith.addf %58, %31 : vector<2x32xf32>
    %cst_20 = arith.constant 1.000000e+00 : f32
    %60 = vector.broadcast %cst_20 : f32 to vector<2x32xf32>
    %61 = arith.cmpf oge, %59, %60 : vector<2x32xf32>
    %62 = arith.extui %61 : vector<2x32xi1> to vector<2x32xi32>
    %63 = arith.sitofp %62 : vector<2x32xi32> to vector<2x32xf32>
    %cst_21 = arith.constant 1.000000e+00 : f32
    %64 = vector.broadcast %cst_21 : f32 to vector<2x32xf32>
    %65 = arith.subf %64, %63 : vector<2x32xf32>
    %66 = arith.mulf %59, %65 : vector<2x32xf32>
    %67 = arith.addf %66, %40 : vector<2x32xf32>
    %cst_22 = arith.constant 1.000000e+00 : f32
    %68 = vector.broadcast %cst_22 : f32 to vector<2x32xf32>
    %69 = arith.cmpf oge, %67, %68 : vector<2x32xf32>
    %70 = arith.extui %69 : vector<2x32xi1> to vector<2x32xi32>
    %71 = arith.sitofp %70 : vector<2x32xi32> to vector<2x32xf32>
    %cst_23 = arith.constant 1.000000e+00 : f32
    %72 = vector.broadcast %cst_23 : f32 to vector<2x32xf32>
    %73 = arith.subf %72, %71 : vector<2x32xf32>
    %74 = arith.mulf %67, %73 : vector<2x32xf32>
    %75 = arith.addf %74, %49 : vector<2x32xf32>
    %cst_24 = arith.constant 1.000000e+00 : f32
    %76 = vector.broadcast %cst_24 : f32 to vector<2x32xf32>
    %77 = arith.cmpf oge, %75, %76 : vector<2x32xf32>
    %78 = arith.extui %77 : vector<2x32xi1> to vector<2x32xi32>
    %79 = arith.sitofp %78 : vector<2x32xi32> to vector<2x32xf32>
    %80 = tpu.concatenate %55, %63, %71, %79 in 0 : vector<2x32xf32>, vector<2x32xf32>, vector<2x32xf32>, vector<2x32xf32> -> vector<8x32xf32>
    %c0_25 = arith.constant 0 : index
    %c0_26 = arith.constant 0 : index
    %81 = vector.load %arg6[%c0_25, %c0_26] : memref<8x32xf32, #tpu.memory_space<vmem>>, vector<8x32xf32>
    tpu.vector_store %arg6[%c0_25, %c0_26], %80 {strides = array<i32>} : memref<8x32xf32, #tpu.memory_space<vmem>>, vector<8x32xf32>,
    return
  }
  func.func @transform_0(%arg0: i32) -> (i32, i32) {
    %c0_i32 = arith.constant 0 : i32
    %c0_i32_0 = arith.constant 0 : i32
    %c0_i32_1 = arith.constant 0 : i32
    return %c0_i32, %c0_i32_0 : i32, i32
  }
  func.func @transform_1(%arg0: i32) -> (i32, i32) {
    %c0_i32 = arith.constant 0 : i32
    %c0_i32_0 = arith.constant 0 : i32
    return %c0_i32, %arg0 : i32, i32
  }
  func.func @transform_2(%arg0: i32) -> (i32, i32) {
    %c0_i32 = arith.constant 0 : i32
    %c0_i32_0 = arith.constant 0 : i32
    return %c0_i32, %arg0 : i32, i32
  }
  func.func @transform_3(%arg0: i32) -> (i32, i32) {
    %c0_i32 = arith.constant 0 : i32
    %c0_i32_0 = arith.constant 0 : i32
    return %c0_i32, %arg0 : i32, i32
  }
  func.func @transform_4(%arg0: i32) -> (i32, i32) {
    %c0_i32 = arith.constant 0 : i32
    %c0_i32_0 = arith.constant 0 : i32
    return %c0_i32, %arg0 : i32, i32
  }
  func.func @transform_5(%arg0: i32) -> (i32, i32) {
    %c0_i32 = arith.constant 0 : i32
    %c0_i32_0 = arith.constant 0 : i32
    return %c0_i32, %arg0 : i32, i32
  }
}

</mosaic_0001>

<llo_original>
// kernel: attention_mechanism_forward.1
$region0: #{attention_mechanism_forward.1}
  #allocation0 [shape = 'u32[]', space=smem, size = 0x4, offset = 0x4, fixed_abs, tag = 'smem constant byte address 0x4 - core index']
  #allocation1 [shape = 'u32[144,128]{1,0:T(1,128)}', space=vmem, size = 0x12000, scoped, tag = 'internal scratch']
  %s0 = inlined_call_operand.vmem [shape: f32[8,48], index: 0, kind: input, shape index: {}]
  %s1 = inlined_call_operand.vmem [shape: f32[8,32], index: 1, kind: input, shape index: {}]
  %s2 = inlined_call_operand.hbm [shape: f32[8,32], index: 2, kind: input, shape index: {}]
  %s3 = inlined_call_operand.hbm [shape: f32[48,64], index: 3, kind: input, shape index: {}]
  %s4 = inlined_call_operand.vmem [shape: f32[1,64], index: 4, kind: input, shape index: {}]
  %s5 = inlined_call_operand.hbm [shape: f32[8,32], index: 5, kind: output, shape index: {}]
  %s6 = sld [smem:[#allocation0]]
  $region38: #{attention_mechanism_forward.1} parent=0
    _
  %s8 = ssub.s32 1, %s6
  %s9 = scalar_select 0, %s8, %s6
  $region1: #{attention_mechanism_forward.1} parent=0
    #allocation2 [shape = 'u8[4096]{0}', space=vmem, size = 0x1000, scoped, tag = 'input window, operand 2, single buffered']
    #allocation3 [shape = 's32[1]{0}', space=sflag, size = 0x4, scoped, tag = 'scoped memory for attention_mechanism_forward.1']
    #allocation4 [shape = 's32[1]{0}', space=sflag, size = 0x4, scoped, tag = 'scoped memory for attention_mechanism_forward.1']
    #allocation5 [shape = 'u8[24576]{0}', space=vmem, size = 0x6000, scoped, tag = 'input window, operand 3, single buffered']
    #allocation6 [shape = 's32[1]{0}', space=sflag, size = 0x4, scoped, tag = 'scoped memory for attention_mechanism_forward.1']
    #allocation7 [shape = 'u8[4096]{0}', space=vmem, size = 0x1000, scoped, tag = 'output window, operand 0, single buffered']
    %10 = vsyncpa [#allocation3], 0
    %11 = vsyncpa [#allocation6], 0
    %12 = vsyncpa [#allocation4], 0
    // Predicated region
    $region2: #{attention_mechanism_forward.1} parent=1 // pred_check
      _
    $region3: #{attention_mechanism_forward.1} parent=1 // pred_check_branch
      %14 = sbr.rel (0) target = $region5
    $region4: #{attention_mechanism_forward.1} parent=1 // pred_region
      _
    $region5: #{attention_mechanism_forward.1} parent=1 // pred_fallthru
      _
    // Predicated region
    $region6: #{attention_mechanism_forward.1} parent=1 // pred_check
      _
    $region7: #{attention_mechanism_forward.1} parent=1 // pred_check_branch
      %16 = sbr.rel (0) target = $region9
    $region8: #{attention_mechanism_forward.1} parent=1 // pred_region
      _
    $region9: #{attention_mechanism_forward.1} parent=1 // pred_fallthru
      _
    // Predicated region
    $region10: #{attention_mechanism_forward.1} parent=1 // pred_check
      _
    $region11: #{attention_mechanism_forward.1} parent=1 // pred_check_branch
      %18 = sbr.rel (0) target = $region13
    $region12: #{attention_mechanism_forward.1} parent=1 // pred_region
      %s20 = ssub.s32 128, 128
      %21 = vsyncadd [#allocation3], %s20
      %s23 = sshll.u32 [#allocation2], 4
      %s24 = int_to_ptr.vmem [resolvable:$true] %s23
      %26 = dma.hbm_to_vmem [thread:$0]  %s2, 128, %s24, [#allocation3]
    $region13: #{attention_mechanism_forward.1} parent=1 // pred_fallthru
      _
    // Predicated region
    $region14: #{attention_mechanism_forward.1} parent=1 // pred_check
      _
    $region15: #{attention_mechanism_forward.1} parent=1 // pred_check_branch
      %28 = sbr.rel (0) target = $region17
    $region16: #{attention_mechanism_forward.1} parent=1 // pred_region
      %s30 = ssub.s32 768, 768
      %31 = vsyncadd [#allocation6], %s30
      %s32 = sshll.u32 [#allocation5], 4
      %s33 = int_to_ptr.vmem [resolvable:$true] %s32
      %38 = dma.hbm_to_vmem [thread:$0]  %s3, 768, %s33, [#allocation6], 128, 128, 8
    $region17: #{attention_mechanism_forward.1} parent=1 // pred_fallthru
      _
    // Predicated region
    $region18: #{attention_mechanism_forward.1} parent=1 // pred_check
      _
    $region19: #{attention_mechanism_forward.1} parent=1 // pred_check_branch
      %40 = sbr.rel (0) target = $region21
    $region20: #{attention_mechanism_forward.1} parent=1 // pred_region
      _
    $region21: #{attention_mechanism_forward.1} parent=1 // pred_fallthru
      _
    // Predicated region
    $region22: #{attention_mechanism_forward.1} parent=1 // pred_check
      _
    $region23: #{attention_mechanism_forward.1} parent=1 // pred_check_branch
      %42 = sbr.rel (0) target = $region25
    $region24: #{attention_mechanism_forward.1} parent=1 // pred_region
      %43 = dma.done [#allocation3], 128
    $region25: #{attention_mechanism_forward.1} parent=1 // pred_fallthru
      _
    // Predicated region
    $region26: #{attention_mechanism_forward.1} parent=1 // pred_check
      _
    $region27: #{attention_mechanism_forward.1} parent=1 // pred_check_branch
      %45 = sbr.rel (0) target = $region29
    $region28: #{attention_mechanism_forward.1} parent=1 // pred_region
      %46 = dma.done [#allocation6], 768
    $region29: #{attention_mechanism_forward.1} parent=1 // pred_fallthru
      _
    %v47 = vld [vmem:[%s0] sm:$0xff]
    %v48 = vld [vmem:[#allocation5] sm:$0xff]
    %v49 = vld [vmem:[#allocation5 + $0x8] sm:$0xff]
    %v50 = vld [vmem:[#allocation5 + $0x10] sm:$0xff]
    %v51 = vld [vmem:[#allocation5 + $0x18] sm:$0xff]
    %v52 = vld [vmem:[#allocation5 + $0x20] sm:$0xff]
    %v53 = vld [vmem:[#allocation5 + $0x28] sm:$0xff]
    %v54 = vld [vmem:[%s4] sm:$0x1]
    %v56 = vlaneseq
    %v57 = vshrl.u32 %v56, 7
    %v58 = vsub.s32 0, %v57
    %v59 = vrot.slane %v54, %v58
    %vm61 = vcmask 392192
    %v63 = vsel %vm61, %v47, 0
    %65 = vmatprep.subr.mxu0 0.0
    %66 = vmatpush1.msra.mxu0 %v48
    %67 = vmatprep.subr.mxu0 0.0
    %68 = vmatpush1.msra.mxu0 %v49
    %69 = vmatprep.subr.mxu0 0.0
    %70 = vmatpush1.msra.mxu0 %v50
    %71 = vmatprep.subr.mxu0 0.0
    %72 = vmatpush1.msra.mxu0 %v51
    %73 = vmatprep.subr.mxu0 0.0
    %74 = vmatpush1.msra.mxu0 %v52
    %75 = vmatprep.subr.mxu0 0.0
    %76 = vmatpush1.msra.mxu0 %v53
    %77 = vmatprep.subr.mxu0 0.0
    %78 = vmatpush1.msra.mxu0 0.0
    %79 = vmatprep.subr.mxu0 0.0
    %80 = vmatpush1.msra.mxu0 0.0
    %81 = vmatprep.subr.mxu0 0.0
    %82 = vmatpush1.msra.mxu0 0.0
    %83 = vmatprep.subr.mxu0 0.0
    %84 = vmatpush1.msra.mxu0 0.0
    %85 = vmatprep.subr.mxu0 0.0
    %86 = vmatpush1.msra.mxu0 0.0
    %87 = vmatprep.subr.mxu0 0.0
    %88 = vmatpush1.msra.mxu0 0.0
    %89 = vmatprep.subr.mxu0 0.0
    %90 = vmatpush1.msra.mxu0 0.0
    %91 = vmatprep.subr.mxu0 0.0
    %92 = vmatpush1.msra.mxu0 0.0
    %93 = vmatprep.subr.mxu0 0.0
    %94 = vmatpush1.msra.mxu0 0.0
    %95 = vmatprep.subr.mxu0 0.0
    %96 = vmatpush1.msra.mxu0 0.0
    %97 = vmatprep.subr.mxu0 0.0
    %98 = vmatpush1.msra.mxu0 0.0
    %99 = vmatprep.subr.mxu0 0.0
    %100 = vmatpush1.msra.mxu0 0.0
    %101 = vmatprep.subr.mxu0 0.0
    %102 = vmatpush1.msra.mxu0 0.0
    %103 = vmatprep.subr.mxu0 0.0
    %104 = vmatpush1.msra.mxu0 0.0
    %105 = vmatprep.subr.mxu0 0.0
    %106 = vmatpush1.msra.mxu0 0.0
    %107 = vmatprep.subr.mxu0 0.0
    %108 = vmatpush1.msra.mxu0 0.0
    %109 = vmatprep.subr.mxu0 0.0
    %110 = vmatpush1.msra.mxu0 0.0
    %111 = vmatprep.subr.mxu0 0.0
    %112 = vmatpush1.msra.mxu0 0.0
    %113 = vmatprep.subr.mxu0 0.0
    %114 = vmatpush1.msra.mxu0 0.0
    %115 = vmatprep.subr.mxu0 0.0
    %116 = vmatpush1.msra.mxu0 0.0
    %117 = vmatprep.subr.mxu0 0.0
    %118 = vmatpush1.msra.mxu0 0.0
    %119 = vmatprep.subr.mxu0 0.0
    %120 = vmatpush1.msra.mxu0 0.0
    %121 = vmatprep.subr.mxu0 0.0
    %122 = vmatpush1.msra.mxu0 0.0
    %123 = vmatprep.subr.mxu0 0.0
    %124 = vmatpush1.msra.mxu0 0.0
    %125 = vmatprep.subr.mxu0 0.0
    %126 = vmatpush1.msra.mxu0 0.0
    %127 = vmatprep.subr.mxu0 0.0
    %128 = vmatpush1.msra.mxu0 0.0
    %129 = vmatprep.mubr.f32.mxu0 0.0
    %130 = vmatmul.mubr.f32.gmra.mrb[0].mxu0 %v63
    %v131 = vpop.f32.mrb[0].mxu0
    %v132 = vadd.f32 %v59, %v131
    %v133 = vpop.f32.mrb[0].mxu0
    %134 = vdwg.mxu0
    %v135 = vld [vmem:[%s1] sm:$0xff]
    %v136 = vmul.f32 %v132, %v135
    %v137 = vld [vmem:[#allocation2] sm:$0xff]
    %139 = vrot.lane.b32.xlu0 %v137, 32
    %v140 = vpop.permute.xlu0 %139
    %v142 = vmul.f32 %v132, %v140
    %144 = vrot.lane.b32.xlu0 %v142, 96
    %v145 = vpop.permute.xlu0 %144
    %v147 = vadd.f32 %v136, %v145
    %149 = vrot.lane.b32.xlu0 %v132, 96
    %v150 = vpop.permute.xlu0 %149
    %v152 = vadd.f32 %v132, %v150
    %vm153 = vcmask 254976
    %v154 = vsel %vm153, %v152, 0.0
    %v155 = vrot.slane %v154, 4
    %v156 = vadd.f32 %v154, %v155
    %v157 = vrot.slane %v156, 2
    %v158 = vadd.f32 %v156, %v157
    %v159 = vrot.slane %v158, 1
    %v160 = vadd.f32 %v158, %v159
    %v161 = vadd.f32 %v160, 1e-10
    %v162 = vrcp.pop %v161
    %v163 = vmul.f32 %v147, %v162
    %v165 = vrot.slane %v152, 2
    %v167 = vsel %vm153, %v165, 0.0
    %v168 = vrot.slane %v167, 4
    %v169 = vadd.f32 %v167, %v168
    %v170 = vrot.slane %v169, 2
    %v171 = vadd.f32 %v169, %v170
    %v172 = vrot.slane %v171, 1
    %v173 = vadd.f32 %v171, %v172
    %v174 = vadd.f32 %v173, 1e-10
    %v175 = vrcp.pop %v174
    %v176 = vmul.f32 %v147, %v175
    %v177 = vrot.slane %v152, 4
    %v179 = vsel %vm153, %v177, 0.0
    %v180 = vrot.slane %v179, 4
    %v181 = vadd.f32 %v179, %v180
    %v182 = vrot.slane %v181, 2
    %v183 = vadd.f32 %v181, %v182
    %v184 = vrot.slane %v183, 1
    %v185 = vadd.f32 %v183, %v184
    %v186 = vadd.f32 %v185, 1e-10
    %v187 = vrcp.pop %v186
    %v188 = vmul.f32 %v147, %v187
    %v189 = vrot.slane %v152, 6
    %v191 = vsel %vm153, %v189, 0.0
    %v192 = vrot.slane %v191, 4
    %v193 = vadd.f32 %v191, %v192
    %v194 = vrot.slane %v193, 2
    %v195 = vadd.f32 %v193, %v194
    %v196 = vrot.slane %v195, 1
    %v197 = vadd.f32 %v195, %v196
    %v198 = vadd.f32 %v197, 1e-10
    %v199 = vrcp.pop %v198
    %v200 = vmul.f32 %v147, %v199
    %v201 = vadd.f32 %v163, 0.0
    %vm202 = vcmp.ge.f32.partialorder %v201, 1.0
    %v203 = vsel %vm202, 1, 0
    %v204 = vcvt.s32.f32 %v203
    %v205 = vsub.f32 1.0, %v204
    %v206 = vmul.f32 %v201, %v205
    %v208 = vrot.slane %v176, 2
    %v210 = vadd.f32 %v206, %v208
    %vm211 = vcmp.ge.f32.partialorder %v210, 1.0
    %v212 = vsel %vm211, 1, 0
    %v213 = vcvt.s32.f32 %v212
    %v214 = vsub.f32 1.0, %v213
    %v215 = vmul.f32 %v210, %v214
    %v217 = vrot.slane %v188, 4
    %v219 = vadd.f32 %v215, %v217
    %vm220 = vcmp.ge.f32.partialorder %v219, 1.0
    %v221 = vsel %vm220, 1, 0
    %v222 = vcvt.s32.f32 %v221
    %v223 = vsub.f32 1.0, %v222
    %v224 = vmul.f32 %v219, %v223
    %v226 = vrot.slane %v200, 6
    %v228 = vadd.f32 %v224, %v226
    %vm229 = vcmp.ge.f32.partialorder %v228, 1.0
    %v230 = vsel %vm229, 1, 0
    %v231 = vcvt.s32.f32 %v230
    %v233 = vrot.slane %v213, 6
    %v236 = vrot.slane %v222, 4
    %v239 = vrot.slane %v231, 2
    %vm241 = vcmask 1041408
    %v242 = vsel %vm241, %v204, %v233
    %vm243 = vcmask 1043456
    %v244 = vsel %vm243, %v242, %v236
    %vm245 = vcmask 1045504
    %v246 = vsel %vm245, %v244, %v239
    %vm247 = vcmask 261120
    %248 = vst.msk [vmem:[#allocation7] sm:$0xff] %vm247, %v246
    // Predicated region
    $region30: #{attention_mechanism_forward.1} parent=1 // pred_check
      _
    $region31: #{attention_mechanism_forward.1} parent=1 // pred_check_branch
      %250 = sbr.rel (0) target = $region33
    $region32: #{attention_mechanism_forward.1} parent=1 // pred_region
      %s252 = ssub.s32 128, 128
      %253 = vsyncadd [#allocation4], %s252
      %s255 = sshll.u32 [#allocation7], 4
      %s256 = int_to_ptr.vmem [resolvable:$true] %s255
      %258 = dma.vmem_to_hbm [thread:$0]  %s256, 128, %s5, [#allocation4]
    $region33: #{attention_mechanism_forward.1} parent=1 // pred_fallthru
      _
    // Predicated region
    $region34: #{attention_mechanism_forward.1} parent=1 // pred_check
      _
    $region35: #{attention_mechanism_forward.1} parent=1 // pred_check_branch
      %260 = sbr.rel (0) target = $region37
    $region36: #{attention_mechanism_forward.1} parent=1 // pred_region
      %261 = dma.done [#allocation4], 128
    $region37: #{attention_mechanism_forward.1} parent=1 // pred_fallthru
      _
    %262 = vsyncpa [#allocation3], 1
    %263 = vsyncpa [#allocation6], 1
    %264 = vsyncpa [#allocation4], 1

</llo_original>
